<compile_context>
chip_gen: v5e
topology: v5e:2x2
jax: 0.10.0
libtpu: 0.0.40
codegen_flags: <defaults>
</compile_context>

<pallas_src>
import jax
import jax.numpy as jnp
from jax.experimental import pallas as pl
from jax.experimental.pallas import tpu as pltpu


# ---------------------------------------------------------------------------
# Kernel bodies
# ---------------------------------------------------------------------------
def _glu_math(a, g, out_dtype):
    """out-half * sigmoid(gate-half), dtype-aware."""
    gf = g.astype(jnp.float32)
    if jnp.dtype(out_dtype) == jnp.dtype(jnp.float32):
        # Exact sigmoid in f32 (v5e has no bf16 VPU/EUP anyway).
        return (a.astype(jnp.float32) * jax.nn.sigmoid(gf)).astype(out_dtype)
    # Low-precision inputs: exp on the EUP + approx reciprocal keeps the VALU
    # slot free; final multiply stays in the narrow dtype (HBM-bound kernel).
    sig = pl.reciprocal(1.0 + jnp.exp(-gf), approx=True)
    return a * sig.astype(a.dtype)


def _glu_kernel_pair(a_ref, g_ref, o_ref):
    # a_ref / g_ref: same tile shape as o_ref; halves delivered by BlockSpecs.
    o_ref[...] = _glu_math(a_ref[...], g_ref[...], o_ref.dtype)


def _glu_kernel_fused(x_ref, o_ref):
    # Fallback for lane-unaligned half widths: slice the Ref (not a loaded
    # value) so only the needed halves are materialized.
    d = o_ref.shape[-1]
    o_ref[...] = _glu_math(x_ref[:, :d], x_ref[:, d:], o_ref.dtype)


# ---------------------------------------------------------------------------
# Tiling / VMEM budget helpers
# ---------------------------------------------------------------------------
def _vmem_budget():
    """(per-half-input-block budget bytes, vmem_limit_bytes), per TPU gen."""
    vmem_bytes = 64 * 1024 * 1024  # conservative default (v7x-class)
    try:
        info = pltpu.get_tpu_info()
        for name in ("vmem_capacity_bytes", "vmem_bytes", "vmem_size_bytes"):
            v = getattr(info, name, None)
            if v:
                vmem_bytes = int(v)
                break
    except Exception:
        pass
    if vmem_bytes >= 96 * 1024 * 1024:
        # v5e / v6e: 128 MiB physical VMEM -> ~48 MiB double-buffered footprint.
        return 8 * 1024 * 1024, 56 * 1024 * 1024
    # v7x-class: 64 MiB physical VMEM -> ~24 MiB double-buffered footprint.
    return 4 * 1024 * 1024, 28 * 1024 * 1024


def _pick_tile(extent, unit_bytes, budget_bytes, min_steps=8, min_tile=8,
               max_tile=8192):
    """Power-of-two tile along an axis of length `extent`.

    Grows while `tile * unit_bytes` fits `budget_bytes`, then shrinks (down to
    `min_tile`) so the grid keeps at least `min_steps` steps for pipelining /
    both v7x TensorCores.  Ragged final blocks are handled by a cdiv grid.
    """
    if extent <= min_tile:
        return extent
    tile = min_tile
    while (tile * 2 <= max_tile and tile < extent
           and tile * 2 * unit_bytes <= budget_bytes):
        tile *= 2
    while tile > min_tile and pl.cdiv(extent, tile) < min_steps:
        tile //= 2
    return tile


# ---------------------------------------------------------------------------
# pallas_call wrappers
# ---------------------------------------------------------------------------
def _glu_lastdim(x2d, half_budget, vmem_limit):
    """GLU on a 2-D (rows, 2*D) view; split along the last (lane) axis."""
    m, two_d = x2d.shape
    d = two_d // 2
    itemsize = x2d.dtype.itemsize
    cparams = pltpu.CompilerParams(dimension_semantics=("parallel",),
                                   vmem_limit_bytes=vmem_limit)

    if d % 128 == 0:
        # Lane-aligned half: pass the array twice; the two in_specs pick
        # feature-block 0 (out) and 1 (gate) — no in-kernel slicing at all.
        tm = _pick_tile(m, d * itemsize, half_budget)
        return pl.pallas_call(
            _glu_kernel_pair,
            out_shape=jax.ShapeDtypeStruct((m, d), x2d.dtype),
            grid_spec=pltpu.PrefetchScalarGridSpec(
                num_scalar_prefetch=0,
                grid=(pl.cdiv(m, tm),),
                in_specs=[
                    pl.BlockSpec((tm, d), lambda i: (i, 0)),
                    pl.BlockSpec((tm, d), lambda i: (i, 1)),
                ],
                out_specs=pl.BlockSpec((tm, d), lambda i: (i, 0)),
            ),
            compiler_params=cparams,
        )(x2d, x2d)

    # Unaligned half width: load the full-width (tm, 2D) block (last dim equals
    # the full array dim, so always layout-legal) and slice the Ref in-kernel.
    tm = _pick_tile(m, two_d * itemsize, 2 * half_budget)
    return pl.pallas_call(
        _glu_kernel_fused,
        out_shape=jax.ShapeDtypeStruct((m, d), x2d.dtype),
        grid_spec=pltpu.PrefetchScalarGridSpec(
            num_scalar_prefetch=0,
            grid=(pl.cdiv(m, tm),),
            in_specs=[pl.BlockSpec((tm, two_d), lambda i: (i, 0))],
            out_specs=pl.BlockSpec((tm, d), lambda i: (i, 0)),
        ),
        compiler_params=cparams,
    )(x2d)


def _glu_middim(x4, half_budget, vmem_limit):
    """GLU on a 4-D (pre, 2, D, post) view; split axis expressed via BlockSpecs,
    trailing `post` axis stays on lanes (no transpose)."""
    pre, _, d, post = x4.shape
    itemsize = x4.dtype.itemsize

    # Lane tile: full `post` when modest (equal-to-full-dim is always legal),
    # else a lane-dense multiple of 128 with a cdiv-ragged tail.
    tq = post if post <= 2048 else 2048
    # Sublane tile along the halved split axis, sized to the VMEM budget while
    # keeping >= 8 total grid steps when possible.
    steps_other = pre * pl.cdiv(post, tq)
    min_steps_d = max(1, pl.cdiv(8, steps_other))
    td = _pick_tile(d, tq * itemsize, half_budget, min_steps=min_steps_d)

    grid = (pre, pl.cdiv(d, td), pl.cdiv(post, tq))
    return pl.pallas_call(
        _glu_kernel_pair,
        out_shape=jax.ShapeDtypeStruct((pre, d, post), x4.dtype),
        grid_spec=pltpu.PrefetchScalarGridSpec(
            num_scalar_prefetch=0,
            grid=grid,
            in_specs=[
                pl.BlockSpec((None, None, td, tq),
                             lambda p, i, j: (p, 0, i, j)),   # out half
                pl.BlockSpec((None, None, td, tq),
                             lambda p, i, j: (p, 1, i, j)),   # gate half
            ],
            out_specs=pl.BlockSpec((None, td, tq), lambda p, i, j: (p, i, j)),
        ),
        compiler_params=pltpu.CompilerParams(
            dimension_semantics=("parallel", "parallel", "parallel"),
            vmem_limit_bytes=vmem_limit),
    )(x4, x4)


def glu(x, dim=-1):
    """Pallas GLU: split `x` in half along `dim`, return out * sigmoid(gate)."""
    ndim = x.ndim
    dim = dim % ndim
    two_d = x.shape[dim]
    assert two_d % 2 == 0, "GLU split dimension must be even"
    d = two_d // 2
    out_shape = x.shape[:dim] + (d,) + x.shape[dim + 1:]

    pre = 1
    for s in x.shape[:dim]:
        pre *= s
    post = 1
    for s in x.shape[dim + 1:]:
        post *= s

    half_budget, vmem_limit = _vmem_budget()

    if post == 1:
        # Split axis is (effectively) the last one: 2-D lane-dense view.
        out2 = _glu_lastdim(x.reshape(pre, two_d), half_budget, vmem_limit)
        return out2.reshape(out_shape)

    if post >= 128:
        # Channels-first style split with a lane-dense trailing extent:
        # free reshape only, split expressed entirely via BlockSpecs.
        out3 = _glu_middim(x.reshape(pre, 2, d, post), half_budget, vmem_limit)
        return out3.reshape(out_shape)

    # Narrow trailing extent (< 128 lanes): fall back to putting the split
    # axis on lanes via a transpose round trip.
    # TODO(synk): fold leading rows into lanes instead of transposing here.
    xl = jnp.moveaxis(x, dim, -1)
    lead = xl.shape[:-1]
    m = 1
    for s in lead:
        m *= s
    out2 = _glu_lastdim(xl.reshape(m, two_d), half_budget, vmem_limit)
    return jnp.moveaxis(out2.reshape(*lead, d), -1, dim)


# ---------------------------------------------------------------------------
# Reference + self-test
# ---------------------------------------------------------------------------
def reference_glu(x, dim=-1):
    a, g = jnp.split(x, 2, axis=dim)
    return a * jax.nn.sigmoid(g)


if __name__ == "__main__":
    key = jax.random.PRNGKey(0)
    k1, k2, k3, k4 = jax.random.split(key, 4)

    # Case 1: split along the last (feature) dim, f32: [2, 8, 256] -> [2, 8, 128]
    x1 = jax.random.normal(k1, (2, 8, 256), dtype=jnp.float32)
    o1 = jax.block_until_ready(glu(x1, dim=-1))
    r1 = reference_glu(x1, dim=-1)
    assert o1.shape == (2, 8, 128)
    assert jnp.allclose(o1, r1, atol=1e-5, rtol=1e-5)

    # Case 2: channels-first split (dim=1) with lane-dense trailing axis:
    # [2, 8, 256] -> [2, 4, 256], handled WITHOUT any transpose.
    x2 = jax.random.normal(k2, (2, 8, 256), dtype=jnp.float32)
    o2 = jax.block_until_ready(glu(x2, dim=1))
    r2 = reference_glu(x2, dim=1)
    assert o2.shape == (2, 4, 256)
    assert jnp.allclose(o2, r2, atol=1e-5, rtol=1e-5)

    # Case 3: channels-first split with a narrow trailing axis (< 128 lanes):
    # [2, 64, 8] -> [2, 32, 8], exercises the transpose fallback + ref slicing.
    x3 = jax.random.normal(k3, (2, 64, 8), dtype=jnp.float32)
    o3 = jax.block_until_ready(glu(x3, dim=1))
    r3 = reference_glu(x3, dim=1)
    assert o3.shape == (2, 32, 8)
    assert jnp.allclose(o3, r3, atol=1e-5, rtol=1e-5)

    # Case 4: bf16 last-dim split (approx-reciprocal sigmoid path).
    x4 = jax.random.normal(k4, (4, 16, 256), dtype=jnp.bfloat16)
    o4 = jax.block_until_ready(glu(x4, dim=-1))
    r4 = reference_glu(x4.astype(jnp.float32), dim=-1).astype(jnp.bfloat16)
    assert o4.shape == (4, 16, 128)
    assert jnp.allclose(o4.astype(jnp.float32), r4.astype(jnp.float32),
                        atol=2e-2, rtol=2e-2)

    print("KERNEL_OK")
</pallas_src>

<mosaic_0001>
module attributes {stable_mosaic.version = 11 : i64} {
  func.func @_glu_kernel_pair(%arg0: i32, %arg1: memref<8x128xf32, #tpu.memory_space<vmem>>, %arg2: memref<8x128xf32, #tpu.memory_space<vmem>>, %arg3: memref<8x128xf32, #tpu.memory_space<vmem>>) attributes {dimension_semantics = [#tpu.dimension_semantics<parallel>], iteration_bounds = array<i64: 2>, scalar_prefetch = 0 : i64, scratch_operands = 0 : i64, tpu.core_type = #tpu.core_type<tc>, window_params = [{transform_indices = @transform_0, window_bounds = array<i64: 8, 128>}, {transform_indices = @transform_1, window_bounds = array<i64: 8, 128>}, {transform_indices = @transform_2, window_bounds = array<i64: 8, 128>}]} {
    %c0 = arith.constant 0 : index
    %c0_0 = arith.constant 0 : index
    %0 = vector.load %arg1[%c0, %c0_0] : memref<8x128xf32, #tpu.memory_space<vmem>>, vector<8x128xf32>
    %c0_1 = arith.constant 0 : index
    %c0_2 = arith.constant 0 : index
    %1 = vector.load %arg2[%c0_1, %c0_2] : memref<8x128xf32, #tpu.memory_space<vmem>>, vector<8x128xf32>
    %2 = arith.negf %1 : vector<8x128xf32>
    %3 = math.exp %2 : vector<8x128xf32>
    %cst = arith.constant 1.000000e+00 : f32
    %4 = vector.broadcast %cst : f32 to vector<8x128xf32>
    %5 = arith.addf %4, %3 : vector<8x128xf32>
    %6 = arith.divf %4, %5 : vector<8x128xf32>
    %7 = arith.mulf %0, %6 : vector<8x128xf32>
    %c0_3 = arith.constant 0 : index
    %c0_4 = arith.constant 0 : index
    %8 = vector.load %arg3[%c0_3, %c0_4] : memref<8x128xf32, #tpu.memory_space<vmem>>, vector<8x128xf32>
    tpu.vector_store %arg3[%c0_3, %c0_4], %7 {strides = array<i32>} : memref<8x128xf32, #tpu.memory_space<vmem>>, vector<8x128xf32>,
    return
  }
  func.func @transform_0(%arg0: i32) -> (i32, i32) {
    %c0_i32 = arith.constant 0 : i32
    %c0_i32_0 = arith.constant 0 : i32
    return %arg0, %c0_i32 : i32, i32
  }
  func.func @transform_1(%arg0: i32) -> (i32, i32) {
    %c1_i32 = arith.constant 1 : i32
    %c0_i32 = arith.constant 0 : i32
    return %arg0, %c1_i32 : i32, i32
  }
  func.func @transform_2(%arg0: i32) -> (i32, i32) {
    %c0_i32 = arith.constant 0 : i32
    %c0_i32_0 = arith.constant 0 : i32
    return %arg0, %c0_i32 : i32, i32
  }
}

</mosaic_0001>

<llo_original>
// kernel: tpu_custom_call.1
$region0: #{tpu_custom_call.1}
  #allocation0 [shape = 'u32[]', space=smem, size = 0x4, offset = 0x4, fixed_abs, tag = 'smem constant byte address 0x4 - core index']
  #allocation1 [shape = 'u32[72,128]{1,0:T(1,128)}', space=vmem, size = 0x9000, scoped, tag = 'internal scratch']
  %s0 = inlined_call_operand.hbm [shape: f32[16,256], index: 0, kind: input, shape index: {}]
  %s1 = inlined_call_operand.hbm [shape: f32[16,256], index: 1, kind: input, shape index: {}]
  %s2 = inlined_call_operand.hbm [shape: f32[16,128], index: 2, kind: output, shape index: {}]
  %s3 = sld [smem:[#allocation0]]
  $region49: #{tpu_custom_call.1} parent=0
    _
  %s5 = ssub.s32 1, %s3
  %s6 = scalar_select 0, %s5, %s3
  $region1: #{tpu_custom_call.1} parent=0
    #allocation2 [shape = 'u8[8192]{0}', space=vmem, size = 0x2000, scoped, tag = 'input window, operand 0']
    #allocation3 [shape = 's32[2]{0}', space=sflag, size = 0x8, scoped, tag = 'scoped memory for tpu_custom_call.1']
    #allocation4 [shape = 's32[2]{0}', space=sflag, size = 0x8, scoped, tag = 'scoped memory for tpu_custom_call.1']
    #allocation5 [shape = 'u8[8192]{0}', space=vmem, size = 0x2000, scoped, tag = 'input window, operand 1']
    #allocation6 [shape = 's32[2]{0}', space=sflag, size = 0x8, scoped, tag = 'scoped memory for tpu_custom_call.1']
    #allocation7 [shape = 'u8[8192]{0}', space=vmem, size = 0x2000, scoped, tag = 'output window, operand 0']
    %7 = vsyncpa [#allocation3], 0
    %s8 = scalar_lea.sflag [#allocation3], 1
    %9 = vsyncpa %s8, 0
    %10 = vsyncpa [#allocation6], 0
    %s11 = scalar_lea.sflag [#allocation6], 1
    %12 = vsyncpa %s11, 0
    %13 = vsyncpa [#allocation4], 0
    %s14 = scalar_lea.sflag [#allocation4], 1
    %15 = vsyncpa %s14, 0
    loop: start=0, step=1, limit=4
    $region2: #{tpu_custom_call.1} parent=1 // loop_pre_header
      _
    $region3: #{tpu_custom_call.1} parent=1 // loop_header
      %s17 = sphi 0, %s21
      %p18 = scmp.ge.s32.totalorder %s17, 4
      %s27 = sphi 0, %s29
      %s30 = sphi 0, %s27
      %s31 = sphi 0, %s30
      %s47 = sphi 0, %s31
      %s53 = sphi 0, %s55
      %s56 = sphi 0, %s53
      %s57 = sphi 0, %s56
      %s73 = sphi 0, %s57
      %s79 = sphi 0, %s81
      %s82 = sphi 0, %s79
      %s83 = sphi 0, %s82
      %s99 = sphi 0, %s83
    $region4: #{tpu_custom_call.1} parent=1 // loop_header_branch
      %20 = sbr.rel (%p18) target = $region8
    $region5: #{tpu_custom_call.1} parent=1 // loop_body
      %s22 = ssub.s32 %s17, 1
      %s23 = ssub.s32 %s17, 2
      %s24 = sadd.s32 %s17, 1
      %s25 = ssub.s32 %s17, %s24
      %p26 = scmp.eq.s32.totalorder %s25, 0
      %s28 = sadd.s32 %s27, 1
      %s29 = scalar_select %p26, %s27, %s28
      %p32 = pneg %p26
      %p33 = scmp.eq.s32.totalorder %s17, 1
      %p34 = por %p32, %p33
      %p35 = scmp.ne.s32.totalorder %s27, %s30
      %p36 = scmp.eq.s32.totalorder %s17, 0
      %p37 = por %p35, %p36
      %p38 = scmp.ne.s32.totalorder %s27, %s30
      %p39 = scmp.eq.s32.totalorder %s22, 1
      %p40 = por %p38, %p39
      %p41 = scmp.ne.s32.totalorder %s30, %s31
      %p42 = scmp.eq.s32.totalorder %s22, 0
      %p43 = por %p41, %p42
      %p44 = scmp.ne.s32.totalorder %s30, %s31
      %p45 = scmp.eq.s32.totalorder %s23, 1
      %p46 = por %p44, %p45
      %p48 = scmp.ne.s32.totalorder %s31, %s47
      %p49 = scmp.eq.s32.totalorder %s23, 0
      %p50 = por %p48, %p49
      %s51 = ssub.s32 %s17, %s24
      %p52 = scmp.eq.s32.totalorder %s51, 0
      %s54 = sadd.s32 %s53, 1
      %s55 = scalar_select %p52, %s53, %s54
      %p58 = pneg %p52
      %p59 = scmp.eq.s32.totalorder %s17, 1
      %p60 = por %p58, %p59
      %p61 = scmp.ne.s32.totalorder %s53, %s56
      %p62 = scmp.eq.s32.totalorder %s17, 0
      %p63 = por %p61, %p62
      %p64 = scmp.ne.s32.totalorder %s53, %s56
      %p65 = scmp.eq.s32.totalorder %s22, 1
      %p66 = por %p64, %p65
      %p67 = scmp.ne.s32.totalorder %s56, %s57
      %p68 = scmp.eq.s32.totalorder %s22, 0
      %p69 = por %p67, %p68
      %p70 = scmp.ne.s32.totalorder %s56, %s57
      %p71 = scmp.eq.s32.totalorder %s23, 1
      %p72 = por %p70, %p71
      %p74 = scmp.ne.s32.totalorder %s57, %s73
      %p75 = scmp.eq.s32.totalorder %s23, 0
      %p76 = por %p74, %p75
      %s77 = ssub.s32 %s17, %s24
      %p78 = scmp.eq.s32.totalorder %s77, 0
      %s80 = sadd.s32 %s79, 1
      %s81 = scalar_select %p78, %s79, %s80
      %p84 = pneg %p78
      %p85 = scmp.eq.s32.totalorder %s17, 1
      %p86 = por %p84, %p85
      %p87 = scmp.ne.s32.totalorder %s79, %s82
      %p88 = scmp.eq.s32.totalorder %s17, 0
      %p89 = por %p87, %p88
      %p90 = scmp.ne.s32.totalorder %s79, %s82
      %p91 = scmp.eq.s32.totalorder %s22, 1
      %p92 = por %p90, %p91
      %p93 = scmp.ne.s32.totalorder %s82, %s83
      %p94 = scmp.eq.s32.totalorder %s22, 0
      %p95 = por %p93, %p94
      %p96 = scmp.ne.s32.totalorder %s82, %s83
      %p97 = scmp.eq.s32.totalorder %s23, 1
      %p98 = por %p96, %p97
      %p100 = scmp.ne.s32.totalorder %s83, %s99
      %p101 = scmp.eq.s32.totalorder %s23, 0
      %p102 = por %p100, %p101
      %p103 = scmp.le.s32.totalorder 1, %s17
      %p104 = scmp.lt.s32.totalorder %s17, 3
      %p105 = pnand %p103, %p104
      %p106 = pneg %p105
      // Predicated region
      $region9: #{tpu_custom_call.1} parent=5 // pred_check
        _
      $region10: #{tpu_custom_call.1} parent=5 // pred_check_branch
        %108 = sbr.rel (%p105) target = $region12
      $region11: #{tpu_custom_call.1} parent=5 // pred_region
        %s109 = ssub.s32 %s17, 1
      $region12: #{tpu_custom_call.1} parent=5 // pred_fallthru
        _
      %p110 = scmp.lt.s32.totalorder %s17, 2
      // Predicated region
      $region13: #{tpu_custom_call.1} parent=5 // pred_check
        %p111 = pneg %p110
      $region14: #{tpu_custom_call.1} parent=5 // pred_check_branch
        %113 = sbr.rel (%p111) target = $region16
      $region15: #{tpu_custom_call.1} parent=5 // pred_region
        // Predicated region
        $region17: #{tpu_custom_call.1} parent=15 // pred_check
          %p114 = pneg %p37
        $region18: #{tpu_custom_call.1} parent=15 // pred_check_branch
          %116 = sbr.rel (%p114) target = $region20
        $region19: #{tpu_custom_call.1} parent=15 // pred_region
          %s117 = sand.u32 %s27, 1
          %s118 = scalar_lea.sflag [#allocation3], %s117
          %s119 = sand.u32 %s27, 1
          %s120 = smul.addr %s119, 8
          %s121 = scalar_lea.vmem [#allocation2], %s120
          %123 = vsyncadd %s118, 0
          %s124 = smul.addr %s17, 2
          %s125 = smul.addr %s124, 8
          %s126 = scalar_lea.hbm %s0, %s125
          %s128 = sshll.u32 %s126, 4
          %s129 = int_to_ptr.hbm [resolvable:$true] %s128
          %s130 = sshll.u32 %s121, 4
          %s131 = int_to_ptr.vmem [resolvable:$true] %s130
          %133 = dma.hbm_to_vmem [thread:$0]  %s129, 128, %s131, %s118
        $region20: #{tpu_custom_call.1} parent=15 // pred_fallthru
          _
        // Predicated region
        $region21: #{tpu_custom_call.1} parent=15 // pred_check
          %p134 = pneg %p63
        $region22: #{tpu_custom_call.1} parent=15 // pred_check_branch
          %136 = sbr.rel (%p134) target = $region24
        $region23: #{tpu_custom_call.1} parent=15 // pred_region
          %s137 = sand.u32 %s53, 1
          %s138 = scalar_lea.sflag [#allocation6], %s137
          %s139 = sand.u32 %s53, 1
          %s140 = smul.addr %s139, 8
          %s141 = scalar_lea.vmem [#allocation5], %s140
          %143 = vsyncadd %s138, 0
          %s144 = smul.addr %s17, 2
          %s145 = sadd.s32 1, %s144
          %s146 = smul.addr %s145, 8
          %s147 = scalar_lea.hbm %s1, %s146
          %s149 = sshll.u32 %s147, 4
          %s150 = int_to_ptr.hbm [resolvable:$true] %s149
          %s151 = sshll.u32 %s141, 4
          %s152 = int_to_ptr.vmem [resolvable:$true] %s151
          %154 = dma.hbm_to_vmem [thread:$0]  %s150, 128, %s152, %s138
        $region24: #{tpu_custom_call.1} parent=15 // pred_fallthru
          _
      $region16: #{tpu_custom_call.1} parent=5 // pred_fallthru
        _
      %p155 = scmp.le.s32.totalorder 1, %s17
      %p156 = scmp.lt.s32.totalorder %s17, 3
      %p157 = pnand %p155, %p156
      %p158 = pneg %p157
      // Predicated region
      $region25: #{tpu_custom_call.1} parent=5 // pred_check
        _
      $region26: #{tpu_custom_call.1} parent=5 // pred_check_branch
        %160 = sbr.rel (%p157) target = $region28
      $region27: #{tpu_custom_call.1} parent=5 // pred_region
        %s161 = ssub.s32 %s17, 1
        %s162 = sand.u32 %s30, 1
        %s163 = scalar_lea.sflag [#allocation3], %s162
        %s164 = sand.u32 %s30, 1
        %s165 = smul.addr %s164, 8
        %s166 = scalar_lea.vmem [#allocation2], %s165
        // Predicated region
        $region29: #{tpu_custom_call.1} parent=27 // pred_check
          %p167 = pneg %p43
        $region30: #{tpu_custom_call.1} parent=27 // pred_check_branch
          %169 = sbr.rel (%p167) target = $region32
        $region31: #{tpu_custom_call.1} parent=27 // pred_region
          %171 = dma.done %s163, 128
        $region32: #{tpu_custom_call.1} parent=27 // pred_fallthru
          _
        %s172 = sand.u32 %s56, 1
        %s173 = scalar_lea.sflag [#allocation6], %s172
        %s174 = sand.u32 %s56, 1
        %s175 = smul.addr %s174, 8
        %s176 = scalar_lea.vmem [#allocation5], %s175
        // Predicated region
        $region33: #{tpu_custom_call.1} parent=27 // pred_check
          %p177 = pneg %p69
        $region34: #{tpu_custom_call.1} parent=27 // pred_check_branch
          %179 = sbr.rel (%p177) target = $region36
        $region35: #{tpu_custom_call.1} parent=27 // pred_region
          %181 = dma.done %s173, 128
        $region36: #{tpu_custom_call.1} parent=27 // pred_fallthru
          _
        %s182 = sand.u32 %s30, 1
        %s183 = scalar_lea.sflag [#allocation3], %s182
        %s184 = sand.u32 %s30, 1
        %s185 = smul.addr %s184, 8
        %s186 = scalar_lea.vmem [#allocation2], %s185
        %p187 = pneg %p43
        %p188 = pneg %p40
        %s189 = sand.u32 %s56, 1
        %s190 = scalar_lea.sflag [#allocation6], %s189
        %s191 = sand.u32 %s56, 1
        %s192 = smul.addr %s191, 8
        %s193 = scalar_lea.vmem [#allocation5], %s192
        %p194 = pneg %p69
        %p195 = pneg %p66
        %p196 = pneg %p95
        %p197 = pneg %p92
        %s198 = sand.u32 %s82, 1
        %s199 = scalar_lea.sflag [#allocation4], %s198
        %s200 = sand.u32 %s82, 1
        %s201 = smul.addr %s200, 8
        %s202 = scalar_lea.vmem [#allocation7], %s201
        %v203 = vld [vmem:[%s166] sm:$0xff]
        %v204 = vld [vmem:[%s176] sm:$0xff]
        %v205 = vxor.u32 %v204, 2147483648
        %v206 = vmul.f32 %v205, 1.442695
        %v207 = vpow.pop %v206
        %v208 = vadd.f32 %v207, 1.0
        %v209 = vrcp.pop %v208
        %v210 = vmul.f32 %v208, %v209
        %v211 = vsub.f32 1.0, %v210
        %v212 = vmul.f32 %v209, %v211
        %v213 = vadd.f32 %v209, %v212
        %vm214 = vweird.f32 %v208
        %vm215 = vweird.f32 %v209
        %vm216 = vmor %vm214, %vm215
        %v217 = vsel %vm216, %v209, %v213
        %v218 = vand.u32 2147483647, %v208
        %vm219 = vcmp.eq.f32.partialorder %v218, 8.507059e+37
        %v220 = vand.u32 %v208, 2147483648
        %v221 = vor.u32 1.1754944e-38, %v220
        %v222 = vsel %vm219, %v221, %v217
        %v223 = vmul.f32 1.0, %v222
        %v224 = vmul.f32 %v203, %v223
        %225 = vst [vmem:[%s202] sm:$0xff] %v224
        %s226 = sand.u32 %s82, 1
        %s227 = scalar_lea.sflag [#allocation4], %s226
        %s228 = sand.u32 %s82, 1
        %s229 = smul.addr %s228, 8
        %s230 = scalar_lea.vmem [#allocation7], %s229
        // Predicated region
        $region37: #{tpu_custom_call.1} parent=27 // pred_check
          %p231 = pneg %p92
        $region38: #{tpu_custom_call.1} parent=27 // pred_check_branch
          %233 = sbr.rel (%p231) target = $region40
        $region39: #{tpu_custom_call.1} parent=27 // pred_region
          %235 = vsyncadd %s227, 0
          %s236 = smul.addr %s22, 8
          %s237 = scalar_lea.hbm %s2, %s236
          %s239 = sshll.u32 %s230, 4
          %s240 = int_to_ptr.vmem [resolvable:$true] %s239
          %s241 = sshll.u32 %s237, 4
          %s242 = int_to_ptr.hbm [resolvable:$true] %s241
          %244 = dma.vmem_to_hbm [thread:$0]  %s240, 128, %s242, %s227
        $region40: #{tpu_custom_call.1} parent=27 // pred_fallthru
          _
      $region28: #{tpu_custom_call.1} parent=5 // pred_fallthru
        _
      %p245 = scmp.le.s32.totalorder 2, %s17
      // Predicated region
      $region41: #{tpu_custom_call.1} parent=5 // pred_check
        %p246 = pneg %p245
      $region42: #{tpu_custom_call.1} parent=5 // pred_check_branch
        %248 = sbr.rel (%p246) target = $region44
      $region43: #{tpu_custom_call.1} parent=5 // pred_region
        %s249 = ssub.s32 %s17, 2
        // Predicated region
        $region45: #{tpu_custom_call.1} parent=43 // pred_check
          %p250 = pneg %p98
        $region46: #{tpu_custom_call.1} parent=43 // pred_check_branch
          %252 = sbr.rel (%p250) target = $region48
        $region47: #{tpu_custom_call.1} parent=43 // pred_region
          %s253 = sand.u32 %s83, 1
          %s254 = scalar_lea.sflag [#allocation4], %s253
          %s255 = sand.u32 %s83, 1
          %s256 = smul.addr %s255, 8
          %s257 = scalar_lea.vmem [#allocation7], %s256
          %259 = dma.done %s254, 128
        $region48: #{tpu_custom_call.1} parent=43 // pred_fallthru
          _
      $region44: #{tpu_custom_call.1} parent=5 // pred_fallthru
        _
    $region6: #{tpu_custom_call.1} parent=1 // loop_footer
      %s21 = sadd.s32 1, %s17
    $region7: #{tpu_custom_call.1} parent=1 // loop_footer_branch
      %16 = sbr.rel target = $region3
    $region8: #{tpu_custom_call.1} parent=1 // loop_exit
      _
    %260 = vsyncpa [#allocation3], 1
    %s261 = scalar_lea.sflag [#allocation3], 1
    %262 = vsyncpa %s261, 1
    %263 = vsyncpa [#allocation6], 1
    %s264 = scalar_lea.sflag [#allocation6], 1
    %265 = vsyncpa %s264, 1
    %266 = vsyncpa [#allocation4], 1
    %s267 = scalar_lea.sflag [#allocation4], 1
    %268 = vsyncpa %s267, 1

</llo_original>
